<compile_context>
chip_gen: v5e
topology: v5e:2x2
jax: 0.10.0
libtpu: 0.0.40
codegen_flags: <defaults>
</compile_context>

<pallas_src>
import functools
import math

import jax
import jax.numpy as jnp
from jax import lax
from jax.experimental import pallas as pl
from jax.experimental.pallas import tpu as pltpu


def _shift_left(row, d, fill):
    """row: (1, T) -> row shifted left by static offset d, right-padded with `fill`."""
    T = row.shape[1]
    if d == 0:
        return row
    if d >= T:
        return jnp.full_like(row, fill)
    pad = jnp.full((1, d), fill, dtype=row.dtype)
    return jnp.concatenate([row[:, d:], pad], axis=1)


def _be_tagger_kernel(reps_ref, w_ref, b_ref, tmask_ref, sstart_ref, send_ref, spos_ref,
                      packed_ref, scores_ref,
                      *, thr_logit, max_span_width, neg_limit, batch_block):
    # reps_ref:   (bt, T, H) f32      tmask_ref:  (bt, 1, T) f32
    # w_ref:      (H, 2)     f32      b_ref:      (1, 2)     f32
    # sstart_ref: (bt, S, 1) i32      send_ref:   (bt, S, 1) i32 (end - 1, actual E index)
    # spos_ref:   (bt, S, 1) f32      ((span_labels > 0) & span_masks)
    # packed_ref: (bt, 8, T) f32      rows: [0:2]=logits, [2:4]=preds, [4:6]=labels, [6:8]=bce
    # scores_ref: (bt, W, T) f32      scores[d, b] -> span (b, b + d + 1); neg_limit if invalid
    neg = jnp.float32(neg_limit)

    for bi in range(batch_block):          # small static unroll over the batch block
        x = reps_ref[bi]                   # (T, H)
        tmask = tmask_ref[bi]              # (1, T)
        T = x.shape[0]

        # ---- token tag head: Linear(H, 2); threshold in logit space; token mask ----
        logits = jnp.dot(x, w_ref[...], preferred_element_type=jnp.float32) + b_ref[...]  # (T, 2)
        logits_t = jnp.transpose(logits)                                                   # (2, T)
        tok_on = tmask > 0.0                                                               # (1, T)
        preds_t = ((logits_t > thr_logit) & tok_on).astype(jnp.float32)                    # (2, T)

        # ---- make_token_labels: BE labels from gold (positive) spans ----
        starts = sstart_ref[bi]            # (S, 1) i32
        ends = send_ref[bi]                # (S, 1) i32
        pos = spos_ref[bi] > 0.0           # (S, 1) bool
        S = starts.shape[0]
        t_lane = lax.broadcasted_iota(jnp.int32, (S, T), 1)
        b_lab = jnp.max(((t_lane == starts) & pos).astype(jnp.float32),
                        axis=0, keepdims=True)                                             # (1, T)
        e_lab = jnp.max(((t_lane == ends) & pos).astype(jnp.float32),
                        axis=0, keepdims=True)                                             # (1, T)
        labels_t = jnp.concatenate([b_lab, e_lab], axis=0) * tmask                          # (2, T)

        # ---- masked element-wise BCE-with-logits ----
        bce_t = (jnp.maximum(logits_t, 0.0) - logits_t * labels_t
                 + jnp.log1p(jnp.exp(-jnp.abs(logits_t)))) * tmask                          # (2, T)

        # single lane-dense store of all per-token outputs
        packed_ref[bi] = jnp.concatenate([logits_t, preds_t, labels_t, bce_t], axis=0)      # (8, T)

        # ---- banded extract_pred_span_ids: offset d = end - begin, 0 <= d < W ----
        logit_b_row = logits_t[0:1, :]     # (1, T)
        logit_e_row = logits_t[1:2, :]
        pred_b = preds_t[0:1, :] > 0.0
        pred_e_row = preds_t[1:2, :]
        band_rows = []
        for d in range(max_span_width):
            # E-side quantities shifted so lane b sees token b + d; zero pad means the
            # shifted pred is 0 for b + d >= T, which also encodes the geometry bound.
            e_logit_s = _shift_left(logit_e_row, d, 0.0)
            e_pred_s = _shift_left(pred_e_row, d, 0.0)
            valid_d = pred_b & (e_pred_s > 0.0)
            band_rows.append(jnp.where(valid_d, 0.5 * (logit_b_row + e_logit_s), neg))
        scores_ref[bi] = jnp.concatenate(band_rows, axis=0)                                 # (W, T)


def be_tagger_forward(token_reps, token_masks, span_ids, span_masks, span_labels,
                      w_t, bias, *, predict_thd=0.3, max_span_width=4, num_limit=1000.0,
                      batch_block=None):
    """Pallas implementation of BETagger.forward (dense / fixed-shape, banded spans)."""
    B, T, H = token_reps.shape
    S = span_ids.shape[1]
    W = int(max_span_width)
    neg_limit = -float(num_limit)
    thr_logit = float(math.log(predict_thd / (1.0 - predict_thd)))   # sigmoid(x) > thd  <=>  x > thr_logit

    # glue: fixed-shape reshapes / casts (no hot-path compute)
    tmask = token_masks.astype(jnp.float32)[:, None, :]                         # (B, 1, T)
    sstart = span_ids[..., 0].astype(jnp.int32)[:, :, None]                     # (B, S, 1)
    send = (span_ids[..., 1].astype(jnp.int32) - 1)[:, :, None]                 # (B, S, 1)
    spos = ((span_labels > 0) & span_masks).astype(jnp.float32)[:, :, None]     # (B, S, 1)

    # batch elements per grid step: amortize ~0.35us/step overhead, cap unroll at 8
    if batch_block is None:
        per_batch_bytes = 4 * (T * H + T + 3 * S + 8 * T + W * T)
        bt = max(1, min(B, 8, (4 << 20) // max(per_batch_bytes, 1)))
    else:
        bt = max(1, min(int(batch_block), B))
    while B % bt != 0:
        bt -= 1

    kernel = functools.partial(_be_tagger_kernel,
                               thr_logit=thr_logit,
                               max_span_width=W,
                               neg_limit=neg_limit,
                               batch_block=bt)

    out_shapes = (
        jax.ShapeDtypeStruct((B, 8, T), jnp.float32),   # packed per-token outputs
        jax.ShapeDtypeStruct((B, W, T), jnp.float32),   # banded span scores
    )

    grid_spec = pltpu.PrefetchScalarGridSpec(
        num_scalar_prefetch=0,
        grid=(B // bt,),
        in_specs=[
            pl.BlockSpec((bt, T, H), lambda i: (i, 0, 0)),   # token_reps
            pl.BlockSpec((H, 2), lambda i: (0, 0)),          # W^T
            pl.BlockSpec((1, 2), lambda i: (0, 0)),          # bias
            pl.BlockSpec((bt, 1, T), lambda i: (i, 0, 0)),   # token mask (lane = token)
            pl.BlockSpec((bt, S, 1), lambda i: (i, 0, 0)),   # span starts
            pl.BlockSpec((bt, S, 1), lambda i: (i, 0, 0)),   # span ends - 1
            pl.BlockSpec((bt, S, 1), lambda i: (i, 0, 0)),   # positive span indicator
        ],
        out_specs=[
            pl.BlockSpec((bt, 8, T), lambda i: (i, 0, 0)),
            pl.BlockSpec((bt, W, T), lambda i: (i, 0, 0)),
        ],
    )

    packed, scores_band = pl.pallas_call(
        kernel,
        out_shape=out_shapes,
        grid_spec=grid_spec,
        compiler_params=pltpu.CompilerParams(dimension_semantics=("parallel",)),
    )(token_reps.astype(jnp.float32), w_t, bias, tmask, sstart, send, spos)

    # unpack the lane-dense slab back to the module-facing layout (tiny, plain-JAX glue)
    token_logits = jnp.transpose(packed[:, 0:2, :], (0, 2, 1))   # (B, T, 2)
    token_preds = jnp.transpose(packed[:, 2:4, :], (0, 2, 1))    # (B, T, 2) 0/1
    token_labels = jnp.transpose(packed[:, 4:6, :], (0, 2, 1))   # (B, T, 2)
    bce = packed[:, 6:8, :]                                      # (B, 2, T) masked BCE

    # TODO(synk): reference binary_cross_entropy_loss is not defined in the source;
    # here: mean of BCE-with-logits over masked token elements (reduction='mean').
    n_valid = jnp.maximum(jnp.sum(tmask) * 2.0, 1.0)
    tagger_loss = jnp.sum(bce) / n_valid

    # banded span candidates: scores[b, begin, d] -> span (begin, begin + d + 1)
    pred_span_scores = jnp.transpose(scores_band, (0, 2, 1))     # (B, T, W)
    pred_span_valid = pred_span_scores > neg_limit

    return dict(
        token_logits=token_logits,
        token_preds=token_preds,
        token_labels=token_labels,
        pred_span_scores=pred_span_scores,   # neg_limit where invalid
        pred_span_valid=pred_span_valid,     # valid[b, begin, d]; span = (begin, begin + d + 1)
        tagger_loss=tagger_loss,
    )


if __name__ == "__main__":
    # small, module-consistent shapes
    B, T, H, S = 2, 16, 32, 16
    MAX_SPAN_WIDTH = 4
    NUM_LIMIT = 1000.0
    PREDICT_THD = 0.3

    key = jax.random.PRNGKey(0)
    k_reps, k_w, k_start, k_width, k_lab, k_mask = jax.random.split(key, 6)

    token_reps = jax.random.normal(k_reps, (B, T, H), dtype=jnp.float32)

    # token masks: first sequence full length, second padded
    lengths = jnp.array([T, T - 4], dtype=jnp.int32)
    token_masks = (jnp.arange(T)[None, :] < lengths[:, None])

    # gold spans (start, end) with end exclusive (+1 convention), widths <= MAX_SPAN_WIDTH
    starts = jax.random.randint(k_start, (B, S), 0, T)
    widths = jax.random.randint(k_width, (B, S), 1, MAX_SPAN_WIDTH + 1)
    ends = jnp.minimum(starts + widths, T)
    span_ids = jnp.stack([starts, ends], axis=-1).astype(jnp.int32)   # (B, S, 2)
    span_labels = jax.random.randint(k_lab, (B, S), 0, 3).astype(jnp.int32)
    span_masks = jax.random.bernoulli(k_mask, 0.8, (B, S))

    # deterministic Xavier-uniform init of the tag head (weight [2, H] -> stored as W^T [H, 2])
    bound = (6.0 / (H + 2)) ** 0.5
    w_t = jax.random.uniform(k_w, (H, 2), minval=-bound, maxval=bound, dtype=jnp.float32)
    bias = jnp.zeros((1, 2), dtype=jnp.float32)

    out = be_tagger_forward(token_reps, token_masks, span_ids, span_masks, span_labels,
                            w_t, bias,
                            predict_thd=PREDICT_THD,
                            max_span_width=MAX_SPAN_WIDTH,
                            num_limit=NUM_LIMIT)
    out = jax.block_until_ready(out)
    print("KERNEL_OK")
</pallas_src>

<mosaic_0001>
module attributes {stable_mosaic.version = 11 : i64} {
  func.func @_be_tagger_kernel(%arg0: i32, %arg1: memref<2x16x32xf32, #tpu.memory_space<vmem>>, %arg2: memref<32x2xf32, #tpu.memory_space<vmem>>, %arg3: memref<1x2xf32, #tpu.memory_space<vmem>>, %arg4: memref<2x1x16xf32, #tpu.memory_space<vmem>>, %arg5: memref<2x16x1xi32, #tpu.memory_space<vmem>>, %arg6: memref<2x16x1xi32, #tpu.memory_space<vmem>>, %arg7: memref<2x16x1xf32, #tpu.memory_space<vmem>>, %arg8: memref<2x8x16xf32, #tpu.memory_space<vmem>>, %arg9: memref<2x4x16xf32, #tpu.memory_space<vmem>>) attributes {dimension_semantics = [#tpu.dimension_semantics<parallel>], iteration_bounds = array<i64: 1>, scalar_prefetch = 0 : i64, scratch_operands = 0 : i64, tpu.core_type = #tpu.core_type<tc>, window_params = [{transform_indices = @transform_0, window_bounds = array<i64: 2, 16, 32>}, {pipeline_mode = #tpu.pipeline_mode<synchronous>, transform_indices = @transform_1, window_bounds = array<i64: 32, 2>}, {pipeline_mode = #tpu.pipeline_mode<synchronous>, transform_indices = @transform_2, window_bounds = array<i64: 1, 2>}, {transform_indices = @transform_3, window_bounds = array<i64: 2, 1, 16>}, {transform_indices = @transform_4, window_bounds = array<i64: 2, 16, 1>}, {transform_indices = @transform_5, window_bounds = array<i64: 2, 16, 1>}, {transform_indices = @transform_6, window_bounds = array<i64: 2, 16, 1>}, {transform_indices = @transform_7, window_bounds = array<i64: 2, 8, 16>}, {transform_indices = @transform_8, window_bounds = array<i64: 2, 4, 16>}]} {
    %c0 = arith.constant 0 : index
    %c0_0 = arith.constant 0 : index
    %c0_1 = arith.constant 0 : index
    %0 = vector.load %arg1[%c0, %c0_0, %c0_1] : memref<2x16x32xf32, #tpu.memory_space<vmem>>, vector<1x16x32xf32>
    %1 = vector.shape_cast %0 : vector<1x16x32xf32> to vector<16x32xf32>
    %c0_2 = arith.constant 0 : index
    %c0_3 = arith.constant 0 : index
    %c0_4 = arith.constant 0 : index
    %2 = vector.load %arg4[%c0_2, %c0_3, %c0_4] : memref<2x1x16xf32, #tpu.memory_space<vmem>>, vector<1x1x16xf32>
    %3 = vector.shape_cast %2 : vector<1x1x16xf32> to vector<1x16xf32>
    %c0_5 = arith.constant 0 : index
    %c0_6 = arith.constant 0 : index
    %4 = vector.load %arg2[%c0_5, %c0_6] : memref<32x2xf32, #tpu.memory_space<vmem>>, vector<32x2xf32>
    %cst = arith.constant dense<0.000000e+00> : vector<16x2xf32>
    %5 = tpu.matmul %1, %4, %cst {dimension_numbers = #tpu.dot_dimension_numbers<[1], [0], [0], [1], [0, 0, 1, 1], [], []>} : vector<16x32xf32>, vector<32x2xf32>, vector<16x2xf32> -> vector<16x2xf32>
    %c0_7 = arith.constant 0 : index
    %c0_8 = arith.constant 0 : index
    %6 = vector.load %arg3[%c0_7, %c0_8] : memref<1x2xf32, #tpu.memory_space<vmem>>, vector<1x2xf32>
    %7 = vector.broadcast %6 : vector<1x2xf32> to vector<16x2xf32>
    %8 = arith.addf %5, %7 : vector<16x2xf32>
    %9 = tpu.transpose %8, [1, 0] : vector<16x2xf32> -> vector<2x16xf32>
    %cst_9 = arith.constant 0.000000e+00 : f32
    %10 = vector.broadcast %cst_9 : f32 to vector<1x16xf32>
    %11 = arith.cmpf ogt, %3, %10 : vector<1x16xf32>
    %cst_10 = arith.constant -0.847297847 : f32
    %12 = vector.broadcast %cst_10 : f32 to vector<2x16xf32>
    %13 = arith.cmpf ogt, %9, %12 : vector<2x16xf32>
    %14 = vector.broadcast %11 : vector<1x16xi1> to vector<2x16xi1>
    %15 = arith.andi %13, %14 : vector<2x16xi1>
    %16 = arith.extui %15 : vector<2x16xi1> to vector<2x16xi32>
    %17 = arith.sitofp %16 : vector<2x16xi32> to vector<2x16xf32>
    %c0_11 = arith.constant 0 : index
    %c0_12 = arith.constant 0 : index
    %c0_13 = arith.constant 0 : index
    %18 = vector.load %arg5[%c0_11, %c0_12, %c0_13] : memref<2x16x1xi32, #tpu.memory_space<vmem>>, vector<1x16x1xi32>
    %19 = vector.shape_cast %18 : vector<1x16x1xi32> to vector<16x1xi32>
    %c0_14 = arith.constant 0 : index
    %c0_15 = arith.constant 0 : index
    %c0_16 = arith.constant 0 : index
    %20 = vector.load %arg6[%c0_14, %c0_15, %c0_16] : memref<2x16x1xi32, #tpu.memory_space<vmem>>, vector<1x16x1xi32>
    %21 = vector.shape_cast %20 : vector<1x16x1xi32> to vector<16x1xi32>
    %c0_17 = arith.constant 0 : index
    %c0_18 = arith.constant 0 : index
    %c0_19 = arith.constant 0 : index
    %22 = vector.load %arg7[%c0_17, %c0_18, %c0_19] : memref<2x16x1xf32, #tpu.memory_space<vmem>>, vector<1x16x1xf32>
    %23 = vector.shape_cast %22 : vector<1x16x1xf32> to vector<16x1xf32>
    %cst_20 = arith.constant 0.000000e+00 : f32
    %24 = vector.broadcast %cst_20 : f32 to vector<16x1xf32>
    %25 = arith.cmpf ogt, %23, %24 : vector<16x1xf32>
    %26 = tpu.iota {dimensions = array<i32: 1>} : vector<16x16xi32>
    %27 = vector.broadcast %19 : vector<16x1xi32> to vector<16x16xi32>
    %28 = arith.cmpi eq, %26, %27 : vector<16x16xi32>
    %29 = vector.broadcast %25 : vector<16x1xi1> to vector<16x16xi1>
    %30 = arith.andi %28, %29 : vector<16x16xi1>
    %31 = arith.extui %30 : vector<16x16xi1> to vector<16x16xi32>
    %32 = arith.sitofp %31 : vector<16x16xi32> to vector<16x16xf32>
    %cst_21 = arith.constant dense<0xFF800000> : vector<16xf32>
    %33 = vector.multi_reduction <maximumf>, %32, %cst_21 [0] : vector<16x16xf32> to vector<16xf32>
    %34 = vector.shape_cast %33 : vector<16xf32> to vector<1x16xf32>
    %35 = vector.broadcast %21 : vector<16x1xi32> to vector<16x16xi32>
    %36 = arith.cmpi eq, %26, %35 : vector<16x16xi32>
    %37 = vector.broadcast %25 : vector<16x1xi1> to vector<16x16xi1>
    %38 = arith.andi %36, %37 : vector<16x16xi1>
    %39 = arith.extui %38 : vector<16x16xi1> to vector<16x16xi32>
    %40 = arith.sitofp %39 : vector<16x16xi32> to vector<16x16xf32>
    %cst_22 = arith.constant dense<0xFF800000> : vector<16xf32>
    %41 = vector.multi_reduction <maximumf>, %40, %cst_22 [0] : vector<16x16xf32> to vector<16xf32>
    %42 = vector.shape_cast %41 : vector<16xf32> to vector<1x16xf32>
    %43 = tpu.concatenate %34, %42 in 0 : vector<1x16xf32>, vector<1x16xf32> -> vector<2x16xf32>
    %44 = vector.broadcast %3 : vector<1x16xf32> to vector<2x16xf32>
    %45 = arith.mulf %43, %44 : vector<2x16xf32>
    %cst_23 = arith.constant 0.000000e+00 : f32
    %46 = vector.broadcast %cst_23 : f32 to vector<2x16xf32>
    %47 = arith.maximumf %9, %46 : vector<2x16xf32>
    %48 = arith.mulf %9, %45 : vector<2x16xf32>
    %49 = arith.subf %47, %48 : vector<2x16xf32>
    %50 = math.absf %9 : vector<2x16xf32>
    %cst_24 = arith.constant 0.000000e+00 : f32
    %51 = vector.broadcast %cst_24 : f32 to vector<2x16xf32>
    %52 = arith.subf %51, %50 : vector<2x16xf32>
    %53 = math.exp %52 : vector<2x16xf32>
    %54 = math.log1p %53 : vector<2x16xf32>
    %55 = arith.addf %49, %54 : vector<2x16xf32>
    %56 = vector.broadcast %3 : vector<1x16xf32> to vector<2x16xf32>
    %57 = arith.mulf %55, %56 : vector<2x16xf32>
    %58 = tpu.concatenate %9, %17, %45, %57 in 0 : vector<2x16xf32>, vector<2x16xf32>, vector<2x16xf32>, vector<2x16xf32> -> vector<8x16xf32>
    %c0_25 = arith.constant 0 : index
    %c0_26 = arith.constant 0 : index
    %c0_27 = arith.constant 0 : index
    %59 = vector.load %arg8[%c0_25, %c0_26, %c0_27] : memref<2x8x16xf32, #tpu.memory_space<vmem>>, vector<1x8x16xf32>
    %60 = vector.shape_cast %59 : vector<1x8x16xf32> to vector<8x16xf32>
    %61 = vector.shape_cast %58 : vector<8x16xf32> to vector<1x8x16xf32>
    tpu.vector_store %arg8[%c0_25, %c0_26, %c0_27], %61 {strides = array<i32>} : memref<2x8x16xf32, #tpu.memory_space<vmem>>, vector<1x8x16xf32>,
    %62 = vector.extract_strided_slice %9 {offsets = [0, 0], sizes = [1, 16], strides = [1, 1]} : vector<2x16xf32> to vector<1x16xf32>
    %63 = vector.extract_strided_slice %9 {offsets = [1, 0], sizes = [1, 16], strides = [1, 1]} : vector<2x16xf32> to vector<1x16xf32>
    %64 = vector.extract_strided_slice %17 {offsets = [0, 0], sizes = [1, 16], strides = [1, 1]} : vector<2x16xf32> to vector<1x16xf32>
    %cst_28 = arith.constant 0.000000e+00 : f32
    %65 = vector.broadcast %cst_28 : f32 to vector<1x16xf32>
    %66 = arith.cmpf ogt, %64, %65 : vector<1x16xf32>
    %67 = vector.extract_strided_slice %17 {offsets = [1, 0], sizes = [1, 16], strides = [1, 1]} : vector<2x16xf32> to vector<1x16xf32>
    %cst_29 = arith.constant 0.000000e+00 : f32
    %68 = vector.broadcast %cst_29 : f32 to vector<1x16xf32>
    %69 = arith.cmpf ogt, %67, %68 : vector<1x16xf32>
    %70 = arith.andi %66, %69 : vector<1x16xi1>
    %71 = arith.addf %62, %63 : vector<1x16xf32>
    %cst_30 = arith.constant 5.000000e-01 : f32
    %72 = vector.broadcast %cst_30 : f32 to vector<1x16xf32>
    %73 = arith.mulf %72, %71 : vector<1x16xf32>
    %cst_31 = arith.constant -1.000000e+03 : f32
    %74 = vector.broadcast %cst_31 : f32 to vector<1x16xf32>
    %75 = arith.select %70, %73, %74 : vector<1x16xi1>, vector<1x16xf32>
    %cst_32 = arith.constant 0.000000e+00 : f32
    %76 = vector.broadcast %cst_32 : f32 to vector<1x1xf32>
    %77 = vector.extract_strided_slice %63 {offsets = [0, 1], sizes = [1, 15], strides = [1, 1]} : vector<1x16xf32> to vector<1x15xf32>
    %78 = tpu.concatenate %77, %76 in 1 : vector<1x15xf32>, vector<1x1xf32> -> vector<1x16xf32>
    %cst_33 = arith.constant 0.000000e+00 : f32
    %79 = vector.broadcast %cst_33 : f32 to vector<1x1xf32>
    %80 = vector.extract_strided_slice %67 {offsets = [0, 1], sizes = [1, 15], strides = [1, 1]} : vector<1x16xf32> to vector<1x15xf32>
    %81 = tpu.concatenate %80, %79 in 1 : vector<1x15xf32>, vector<1x1xf32> -> vector<1x16xf32>
    %cst_34 = arith.constant 0.000000e+00 : f32
    %82 = vector.broadcast %cst_34 : f32 to vector<1x16xf32>
    %83 = arith.cmpf ogt, %81, %82 : vector<1x16xf32>
    %84 = arith.andi %66, %83 : vector<1x16xi1>
    %85 = arith.addf %62, %78 : vector<1x16xf32>
    %cst_35 = arith.constant 5.000000e-01 : f32
    %86 = vector.broadcast %cst_35 : f32 to vector<1x16xf32>
    %87 = arith.mulf %86, %85 : vector<1x16xf32>
    %cst_36 = arith.constant -1.000000e+03 : f32
    %88 = vector.broadcast %cst_36 : f32 to vector<1x16xf32>
    %89 = arith.select %84, %87, %88 : vector<1x16xi1>, vector<1x16xf32>
    %cst_37 = arith.constant 0.000000e+00 : f32
    %90 = vector.broadcast %cst_37 : f32 to vector<1x2xf32>
    %91 = vector.extract_strided_slice %63 {offsets = [0, 2], sizes = [1, 14], strides = [1, 1]} : vector<1x16xf32> to vector<1x14xf32>
    %92 = tpu.concatenate %91, %90 in 1 : vector<1x14xf32>, vector<1x2xf32> -> vector<1x16xf32>
    %cst_38 = arith.constant 0.000000e+00 : f32
    %93 = vector.broadcast %cst_38 : f32 to vector<1x2xf32>
    %94 = vector.extract_strided_slice %67 {offsets = [0, 2], sizes = [1, 14], strides = [1, 1]} : vector<1x16xf32> to vector<1x14xf32>
    %95 = tpu.concatenate %94, %93 in 1 : vector<1x14xf32>, vector<1x2xf32> -> vector<1x16xf32>
    %cst_39 = arith.constant 0.000000e+00 : f32
    %96 = vector.broadcast %cst_39 : f32 to vector<1x16xf32>
    %97 = arith.cmpf ogt, %95, %96 : vector<1x16xf32>
    %98 = arith.andi %66, %97 : vector<1x16xi1>
    %99 = arith.addf %62, %92 : vector<1x16xf32>
    %cst_40 = arith.constant 5.000000e-01 : f32
    %100 = vector.broadcast %cst_40 : f32 to vector<1x16xf32>
    %101 = arith.mulf %100, %99 : vector<1x16xf32>
    %cst_41 = arith.constant -1.000000e+03 : f32
    %102 = vector.broadcast %cst_41 : f32 to vector<1x16xf32>
    %103 = arith.select %98, %101, %102 : vector<1x16xi1>, vector<1x16xf32>
    %cst_42 = arith.constant 0.000000e+00 : f32
    %104 = vector.broadcast %cst_42 : f32 to vector<1x3xf32>
    %105 = vector.extract_strided_slice %63 {offsets = [0, 3], sizes = [1, 13], strides = [1, 1]} : vector<1x16xf32> to vector<1x13xf32>
    %106 = tpu.concatenate %105, %104 in 1 : vector<1x13xf32>, vector<1x3xf32> -> vector<1x16xf32>
    %cst_43 = arith.constant 0.000000e+00 : f32
    %107 = vector.broadcast %cst_43 : f32 to vector<1x3xf32>
    %108 = vector.extract_strided_slice %67 {offsets = [0, 3], sizes = [1, 13], strides = [1, 1]} : vector<1x16xf32> to vector<1x13xf32>
    %109 = tpu.concatenate %108, %107 in 1 : vector<1x13xf32>, vector<1x3xf32> -> vector<1x16xf32>
    %cst_44 = arith.constant 0.000000e+00 : f32
    %110 = vector.broadcast %cst_44 : f32 to vector<1x16xf32>
    %111 = arith.cmpf ogt, %109, %110 : vector<1x16xf32>
    %112 = arith.andi %66, %111 : vector<1x16xi1>
    %113 = arith.addf %62, %106 : vector<1x16xf32>
    %cst_45 = arith.constant 5.000000e-01 : f32
    %114 = vector.broadcast %cst_45 : f32 to vector<1x16xf32>
    %115 = arith.mulf %114, %113 : vector<1x16xf32>
    %cst_46 = arith.constant -1.000000e+03 : f32
    %116 = vector.broadcast %cst_46 : f32 to vector<1x16xf32>
    %117 = arith.select %112, %115, %116 : vector<1x16xi1>, vector<1x16xf32>
    %118 = tpu.concatenate %75, %89, %103, %117 in 0 : vector<1x16xf32>, vector<1x16xf32>, vector<1x16xf32>, vector<1x16xf32> -> vector<4x16xf32>
    %c0_47 = arith.constant 0 : index
    %c0_48 = arith.constant 0 : index
    %c0_49 = arith.constant 0 : index
    %119 = vector.load %arg9[%c0_47, %c0_48, %c0_49] : memref<2x4x16xf32, #tpu.memory_space<vmem>>, vector<1x4x16xf32>
    %120 = vector.shape_cast %119 : vector<1x4x16xf32> to vector<4x16xf32>
    %121 = vector.shape_cast %118 : vector<4x16xf32> to vector<1x4x16xf32>
    tpu.vector_store %arg9[%c0_47, %c0_48, %c0_49], %121 {strides = array<i32>} : memref<2x4x16xf32, #tpu.memory_space<vmem>>, vector<1x4x16xf32>,
    %c1 = arith.constant 1 : index
    %c0_50 = arith.constant 0 : index
    %c0_51 = arith.constant 0 : index
    %122 = vector.load %arg1[%c1, %c0_50, %c0_51] : memref<2x16x32xf32, #tpu.memory_space<vmem>>, vector<1x16x32xf32>
    %123 = vector.shape_cast %122 : vector<1x16x32xf32> to vector<16x32xf32>
    %c1_52 = arith.constant 1 : index
    %c0_53 = arith.constant 0 : index
    %c0_54 = arith.constant 0 : index
    %124 = vector.load %arg4[%c1_52, %c0_53, %c0_54] : memref<2x1x16xf32, #tpu.memory_space<vmem>>, vector<1x1x16xf32>
    %125 = vector.shape_cast %124 : vector<1x1x16xf32> to vector<1x16xf32>
    %c0_55 = arith.constant 0 : index
    %c0_56 = arith.constant 0 : index
    %126 = vector.load %arg2[%c0_55, %c0_56] : memref<32x2xf32, #tpu.memory_space<vmem>>, vector<32x2xf32>
    %cst_57 = arith.constant dense<0.000000e+00> : vector<16x2xf32>
    %127 = tpu.matmul %123, %126, %cst_57 {dimension_numbers = #tpu.dot_dimension_numbers<[1], [0], [0], [1], [0, 0, 1, 1], [], []>} : vector<16x32xf32>, vector<32x2xf32>, vector<16x2xf32> -> vector<16x2xf32>
    %c0_58 = arith.constant 0 : index
    %c0_59 = arith.constant 0 : index
    %128 = vector.load %arg3[%c0_58, %c0_59] : memref<1x2xf32, #tpu.memory_space<vmem>>, vector<1x2xf32>
    %129 = vector.broadcast %128 : vector<1x2xf32> to vector<16x2xf32>
    %130 = arith.addf %127, %129 : vector<16x2xf32>
    %131 = tpu.transpose %130, [1, 0] : vector<16x2xf32> -> vector<2x16xf32>
    %cst_60 = arith.constant 0.000000e+00 : f32
    %132 = vector.broadcast %cst_60 : f32 to vector<1x16xf32>
    %133 = arith.cmpf ogt, %125, %132 : vector<1x16xf32>
    %cst_61 = arith.constant -0.847297847 : f32
    %134 = vector.broadcast %cst_61 : f32 to vector<2x16xf32>
    %135 = arith.cmpf ogt, %131, %134 : vector<2x16xf32>
    %136 = vector.broadcast %133 : vector<1x16xi1> to vector<2x16xi1>
    %137 = arith.andi %135, %136 : vector<2x16xi1>
    %138 = arith.extui %137 : vector<2x16xi1> to vector<2x16xi32>
    %139 = arith.sitofp %138 : vector<2x16xi32> to vector<2x16xf32>
    %c1_62 = arith.constant 1 : index
    %c0_63 = arith.constant 0 : index
    %c0_64 = arith.constant 0 : index
    %140 = vector.load %arg5[%c1_62, %c0_63, %c0_64] : memref<2x16x1xi32, #tpu.memory_space<vmem>>, vector<1x16x1xi32>
    %141 = vector.shape_cast %140 : vector<1x16x1xi32> to vector<16x1xi32>
    %c1_65 = arith.constant 1 : index
    %c0_66 = arith.constant 0 : index
    %c0_67 = arith.constant 0 : index
    %142 = vector.load %arg6[%c1_65, %c0_66, %c0_67] : memref<2x16x1xi32, #tpu.memory_space<vmem>>, vector<1x16x1xi32>
    %143 = vector.shape_cast %142 : vector<1x16x1xi32> to vector<16x1xi32>
    %c1_68 = arith.constant 1 : index
    %c0_69 = arith.constant 0 : index
    %c0_70 = arith.constant 0 : index
    %144 = vector.load %arg7[%c1_68, %c0_69, %c0_70] : memref<2x16x1xf32, #tpu.memory_space<vmem>>, vector<1x16x1xf32>
    %145 = vector.shape_cast %144 : vector<1x16x1xf32> to vector<16x1xf32>
    %cst_71 = arith.constant 0.000000e+00 : f32
    %146 = vector.broadcast %cst_71 : f32 to vector<16x1xf32>
    %147 = arith.cmpf ogt, %145, %146 : vector<16x1xf32>
    %148 = tpu.iota {dimensions = array<i32: 1>} : vector<16x16xi32>
    %149 = vector.broadcast %141 : vector<16x1xi32> to vector<16x16xi32>
    %150 = arith.cmpi eq, %148, %149 : vector<16x16xi32>
    %151 = vector.broadcast %147 : vector<16x1xi1> to vector<16x16xi1>
    %152 = arith.andi %150, %151 : vector<16x16xi1>
    %153 = arith.extui %152 : vector<16x16xi1> to vector<16x16xi32>
    %154 = arith.sitofp %153 : vector<16x16xi32> to vector<16x16xf32>
    %cst_72 = arith.constant dense<0xFF800000> : vector<16xf32>
    %155 = vector.multi_reduction <maximumf>, %154, %cst_72 [0] : vector<16x16xf32> to vector<16xf32>
    %156 = vector.shape_cast %155 : vector<16xf32> to vector<1x16xf32>
    %157 = vector.broadcast %143 : vector<16x1xi32> to vector<16x16xi32>
    %158 = arith.cmpi eq, %148, %157 : vector<16x16xi32>
    %159 = vector.broadcast %147 : vector<16x1xi1> to vector<16x16xi1>
    %160 = arith.andi %158, %159 : vector<16x16xi1>
    %161 = arith.extui %160 : vector<16x16xi1> to vector<16x16xi32>
    %162 = arith.sitofp %161 : vector<16x16xi32> to vector<16x16xf32>
    %cst_73 = arith.constant dense<0xFF800000> : vector<16xf32>
    %163 = vector.multi_reduction <maximumf>, %162, %cst_73 [0] : vector<16x16xf32> to vector<16xf32>
    %164 = vector.shape_cast %163 : vector<16xf32> to vector<1x16xf32>
    %165 = tpu.concatenate %156, %164 in 0 : vector<1x16xf32>, vector<1x16xf32> -> vector<2x16xf32>
    %166 = vector.broadcast %125 : vector<1x16xf32> to vector<2x16xf32>
    %167 = arith.mulf %165, %166 : vector<2x16xf32>
    %cst_74 = arith.constant 0.000000e+00 : f32
    %168 = vector.broadcast %cst_74 : f32 to vector<2x16xf32>
    %169 = arith.maximumf %131, %168 : vector<2x16xf32>
    %170 = arith.mulf %131, %167 : vector<2x16xf32>
    %171 = arith.subf %169, %170 : vector<2x16xf32>
    %172 = math.absf %131 : vector<2x16xf32>
    %cst_75 = arith.constant 0.000000e+00 : f32
    %173 = vector.broadcast %cst_75 : f32 to vector<2x16xf32>
    %174 = arith.subf %173, %172 : vector<2x16xf32>
    %175 = math.exp %174 : vector<2x16xf32>
    %176 = math.log1p %175 : vector<2x16xf32>
    %177 = arith.addf %171, %176 : vector<2x16xf32>
    %178 = vector.broadcast %125 : vector<1x16xf32> to vector<2x16xf32>
    %179 = arith.mulf %177, %178 : vector<2x16xf32>
    %180 = tpu.concatenate %131, %139, %167, %179 in 0 : vector<2x16xf32>, vector<2x16xf32>, vector<2x16xf32>, vector<2x16xf32> -> vector<8x16xf32>
    %c1_76 = arith.constant 1 : index
    %c0_77 = arith.constant 0 : index
    %c0_78 = arith.constant 0 : index
    %181 = vector.load %arg8[%c1_76, %c0_77, %c0_78] : memref<2x8x16xf32, #tpu.memory_space<vmem>>, vector<1x8x16xf32>
    %182 = vector.shape_cast %181 : vector<1x8x16xf32> to vector<8x16xf32>
    %183 = vector.shape_cast %180 : vector<8x16xf32> to vector<1x8x16xf32>
    tpu.vector_store %arg8[%c1_76, %c0_77, %c0_78], %183 {strides = array<i32>} : memref<2x8x16xf32, #tpu.memory_space<vmem>>, vector<1x8x16xf32>,
    %184 = vector.extract_strided_slice %131 {offsets = [0, 0], sizes = [1, 16], strides = [1, 1]} : vector<2x16xf32> to vector<1x16xf32>
    %185 = vector.extract_strided_slice %131 {offsets = [1, 0], sizes = [1, 16], strides = [1, 1]} : vector<2x16xf32> to vector<1x16xf32>
    %186 = vector.extract_strided_slice %139 {offsets = [0, 0], sizes = [1, 16], strides = [1, 1]} : vector<2x16xf32> to vector<1x16xf32>
    %cst_79 = arith.constant 0.000000e+00 : f32
    %187 = vector.broadcast %cst_79 : f32 to vector<1x16xf32>
    %188 = arith.cmpf ogt, %186, %187 : vector<1x16xf32>
    %189 = vector.extract_strided_slice %139 {offsets = [1, 0], sizes = [1, 16], strides = [1, 1]} : vector<2x16xf32> to vector<1x16xf32>
    %cst_80 = arith.constant 0.000000e+00 : f32
    %190 = vector.broadcast %cst_80 : f32 to vector<1x16xf32>
    %191 = arith.cmpf ogt, %189, %190 : vector<1x16xf32>
    %192 = arith.andi %188, %191 : vector<1x16xi1>
    %193 = arith.addf %184, %185 : vector<1x16xf32>
    %cst_81 = arith.constant 5.000000e-01 : f32
    %194 = vector.broadcast %cst_81 : f32 to vector<1x16xf32>
    %195 = arith.mulf %194, %193 : vector<1x16xf32>
    %cst_82 = arith.constant -1.000000e+03 : f32
    %196 = vector.broadcast %cst_82 : f32 to vector<1x16xf32>
    %197 = arith.select %192, %195, %196 : vector<1x16xi1>, vector<1x16xf32>
    %cst_83 = arith.constant 0.000000e+00 : f32
    %198 = vector.broadcast %cst_83 : f32 to vector<1x1xf32>
    %199 = vector.extract_strided_slice %185 {offsets = [0, 1], sizes = [1, 15], strides = [1, 1]} : vector<1x16xf32> to vector<1x15xf32>
    %200 = tpu.concatenate %199, %198 in 1 : vector<1x15xf32>, vector<1x1xf32> -> vector<1x16xf32>
    %cst_84 = arith.constant 0.000000e+00 : f32
    %201 = vector.broadcast %cst_84 : f32 to vector<1x1xf32>
    %202 = vector.extract_strided_slice %189 {offsets = [0, 1], sizes = [1, 15], strides = [1, 1]} : vector<1x16xf32> to vector<1x15xf32>
    %203 = tpu.concatenate %202, %201 in 1 : vector<1x15xf32>, vector<1x1xf32> -> vector<1x16xf32>
    %cst_85 = arith.constant 0.000000e+00 : f32
    %204 = vector.broadcast %cst_85 : f32 to vector<1x16xf32>
    %205 = arith.cmpf ogt, %203, %204 : vector<1x16xf32>
    %206 = arith.andi %188, %205 : vector<1x16xi1>
    %207 = arith.addf %184, %200 : vector<1x16xf32>
    %cst_86 = arith.constant 5.000000e-01 : f32
    %208 = vector.broadcast %cst_86 : f32 to vector<1x16xf32>
    %209 = arith.mulf %208, %207 : vector<1x16xf32>
    %cst_87 = arith.constant -1.000000e+03 : f32
    %210 = vector.broadcast %cst_87 : f32 to vector<1x16xf32>
    %211 = arith.select %206, %209, %210 : vector<1x16xi1>, vector<1x16xf32>
    %cst_88 = arith.constant 0.000000e+00 : f32
    %212 = vector.broadcast %cst_88 : f32 to vector<1x2xf32>
    %213 = vector.extract_strided_slice %185 {offsets = [0, 2], sizes = [1, 14], strides = [1, 1]} : vector<1x16xf32> to vector<1x14xf32>
    %214 = tpu.concatenate %213, %212 in 1 : vector<1x14xf32>, vector<1x2xf32> -> vector<1x16xf32>
    %cst_89 = arith.constant 0.000000e+00 : f32
    %215 = vector.broadcast %cst_89 : f32 to vector<1x2xf32>
    %216 = vector.extract_strided_slice %189 {offsets = [0, 2], sizes = [1, 14], strides = [1, 1]} : vector<1x16xf32> to vector<1x14xf32>
    %217 = tpu.concatenate %216, %215 in 1 : vector<1x14xf32>, vector<1x2xf32> -> vector<1x16xf32>
    %cst_90 = arith.constant 0.000000e+00 : f32
    %218 = vector.broadcast %cst_90 : f32 to vector<1x16xf32>
    %219 = arith.cmpf ogt, %217, %218 : vector<1x16xf32>
    %220 = arith.andi %188, %219 : vector<1x16xi1>
    %221 = arith.addf %184, %214 : vector<1x16xf32>
    %cst_91 = arith.constant 5.000000e-01 : f32
    %222 = vector.broadcast %cst_91 : f32 to vector<1x16xf32>
    %223 = arith.mulf %222, %221 : vector<1x16xf32>
    %cst_92 = arith.constant -1.000000e+03 : f32
    %224 = vector.broadcast %cst_92 : f32 to vector<1x16xf32>
    %225 = arith.select %220, %223, %224 : vector<1x16xi1>, vector<1x16xf32>
    %cst_93 = arith.constant 0.000000e+00 : f32
    %226 = vector.broadcast %cst_93 : f32 to vector<1x3xf32>
    %227 = vector.extract_strided_slice %185 {offsets = [0, 3], sizes = [1, 13], strides = [1, 1]} : vector<1x16xf32> to vector<1x13xf32>
    %228 = tpu.concatenate %227, %226 in 1 : vector<1x13xf32>, vector<1x3xf32> -> vector<1x16xf32>
    %cst_94 = arith.constant 0.000000e+00 : f32
    %229 = vector.broadcast %cst_94 : f32 to vector<1x3xf32>
    %230 = vector.extract_strided_slice %189 {offsets = [0, 3], sizes = [1, 13], strides = [1, 1]} : vector<1x16xf32> to vector<1x13xf32>
    %231 = tpu.concatenate %230, %229 in 1 : vector<1x13xf32>, vector<1x3xf32> -> vector<1x16xf32>
    %cst_95 = arith.constant 0.000000e+00 : f32
    %232 = vector.broadcast %cst_95 : f32 to vector<1x16xf32>
    %233 = arith.cmpf ogt, %231, %232 : vector<1x16xf32>
    %234 = arith.andi %188, %233 : vector<1x16xi1>
    %235 = arith.addf %184, %228 : vector<1x16xf32>
    %cst_96 = arith.constant 5.000000e-01 : f32
    %236 = vector.broadcast %cst_96 : f32 to vector<1x16xf32>
    %237 = arith.mulf %236, %235 : vector<1x16xf32>
    %cst_97 = arith.constant -1.000000e+03 : f32
    %238 = vector.broadcast %cst_97 : f32 to vector<1x16xf32>
    %239 = arith.select %234, %237, %238 : vector<1x16xi1>, vector<1x16xf32>
    %240 = tpu.concatenate %197, %211, %225, %239 in 0 : vector<1x16xf32>, vector<1x16xf32>, vector<1x16xf32>, vector<1x16xf32> -> vector<4x16xf32>
    %c1_98 = arith.constant 1 : index
    %c0_99 = arith.constant 0 : index
    %c0_100 = arith.constant 0 : index
    %241 = vector.load %arg9[%c1_98, %c0_99, %c0_100] : memref<2x4x16xf32, #tpu.memory_space<vmem>>, vector<1x4x16xf32>
    %242 = vector.shape_cast %241 : vector<1x4x16xf32> to vector<4x16xf32>
    %243 = vector.shape_cast %240 : vector<4x16xf32> to vector<1x4x16xf32>
    tpu.vector_store %arg9[%c1_98, %c0_99, %c0_100], %243 {strides = array<i32>} : memref<2x4x16xf32, #tpu.memory_space<vmem>>, vector<1x4x16xf32>,
    return
  }
  func.func @transform_0(%arg0: i32) -> (i32, i32, i32) {
    %c0_i32 = arith.constant 0 : i32
    %c0_i32_0 = arith.constant 0 : i32
    %c0_i32_1 = arith.constant 0 : i32
    return %arg0, %c0_i32, %c0_i32_0 : i32, i32, i32
  }
  func.func @transform_1(%arg0: i32) -> (i32, i32) {
    %c0_i32 = arith.constant 0 : i32
    %c0_i32_0 = arith.constant 0 : i32
    %c0_i32_1 = arith.constant 0 : i32
    return %c0_i32, %c0_i32_0 : i32, i32
  }
  func.func @transform_2(%arg0: i32) -> (i32, i32) {
    %c0_i32 = arith.constant 0 : i32
    %c0_i32_0 = arith.constant 0 : i32
    %c0_i32_1 = arith.constant 0 : i32
    return %c0_i32, %c0_i32_0 : i32, i32
  }
  func.func @transform_3(%arg0: i32) -> (i32, i32, i32) {
    %c0_i32 = arith.constant 0 : i32
    %c0_i32_0 = arith.constant 0 : i32
    %c0_i32_1 = arith.constant 0 : i32
    return %arg0, %c0_i32, %c0_i32_0 : i32, i32, i32
  }
  func.func @transform_4(%arg0: i32) -> (i32, i32, i32) {
    %c0_i32 = arith.constant 0 : i32
    %c0_i32_0 = arith.constant 0 : i32
    %c0_i32_1 = arith.constant 0 : i32
    return %arg0, %c0_i32, %c0_i32_0 : i32, i32, i32
  }
  func.func @transform_5(%arg0: i32) -> (i32, i32, i32) {
    %c0_i32 = arith.constant 0 : i32
    %c0_i32_0 = arith.constant 0 : i32
    %c0_i32_1 = arith.constant 0 : i32
    return %arg0, %c0_i32, %c0_i32_0 : i32, i32, i32
  }
  func.func @transform_6(%arg0: i32) -> (i32, i32, i32) {
    %c0_i32 = arith.constant 0 : i32
    %c0_i32_0 = arith.constant 0 : i32
    %c0_i32_1 = arith.constant 0 : i32
    return %arg0, %c0_i32, %c0_i32_0 : i32, i32, i32
  }
  func.func @transform_7(%arg0: i32) -> (i32, i32, i32) {
    %c0_i32 = arith.constant 0 : i32
    %c0_i32_0 = arith.constant 0 : i32
    %c0_i32_1 = arith.constant 0 : i32
    return %arg0, %c0_i32, %c0_i32_0 : i32, i32, i32
  }
  func.func @transform_8(%arg0: i32) -> (i32, i32, i32) {
    %c0_i32 = arith.constant 0 : i32
    %c0_i32_0 = arith.constant 0 : i32
    %c0_i32_1 = arith.constant 0 : i32
    return %arg0, %c0_i32, %c0_i32_0 : i32, i32, i32
  }
}

</mosaic_0001>

<llo_original>
// kernel: tpu_custom_call.1
$region0: #{tpu_custom_call.1}
  #allocation0 [shape = 'u32[]', space=smem, size = 0x4, offset = 0x4, fixed_abs, tag = 'smem constant byte address 0x4 - core index']
  #allocation1 [shape = 'u32[72,128]{1,0:T(1,128)}', space=vmem, size = 0x9000, scoped, tag = 'internal scratch']
  %s0 = inlined_call_operand.vmem [shape: f32[2,16,32], index: 0, kind: input, shape index: {}]
  %s1 = inlined_call_operand.vmem [shape: f32[32,2], index: 1, kind: input, shape index: {}]
  %s2 = inlined_call_operand.vmem [shape: f32[1,2], index: 2, kind: input, shape index: {}]
  %s3 = inlined_call_operand.vmem [shape: f32[2,1,16], index: 3, kind: input, shape index: {}]
  %s4 = inlined_call_operand.vmem [shape: s32[2,16,1], index: 4, kind: input, shape index: {}]
  %s5 = inlined_call_operand.vmem [shape: s32[2,16,1], index: 5, kind: input, shape index: {}]
  %s6 = inlined_call_operand.vmem [shape: f32[2,16,1], index: 6, kind: input, shape index: {}]
  %s7 = inlined_call_operand.hbm [shape: f32[2,8,16], index: 7, kind: output, shape index: {0}]
  %s8 = inlined_call_operand.hbm [shape: f32[2,4,16], index: 8, kind: output, shape index: {1}]
  %9 = xla_tuple %s7, %s8
  %s10 = sld [smem:[#allocation0]]
  $region46: #{tpu_custom_call.1} parent=0
    _
  %s12 = ssub.s32 1, %s10
  %s13 = scalar_select 0, %s12, %s10
  $region1: #{tpu_custom_call.1} parent=0
    #allocation2 [shape = 'u8[8192]{0}', space=vmem, size = 0x2000, scoped, tag = 'output window, operand 0, single buffered']
    #allocation3 [shape = 's32[1]{0}', space=sflag, size = 0x4, scoped, tag = 'scoped memory for tpu_custom_call.1']
    #allocation4 [shape = 'u8[4096]{0}', space=vmem, size = 0x1000, scoped, tag = 'output window, operand 1, single buffered']
    #allocation5 [shape = 's32[1]{0}', space=sflag, size = 0x4, scoped, tag = 'scoped memory for tpu_custom_call.1']
    %14 = vsyncpa [#allocation3], 0
    %15 = vsyncpa [#allocation5], 0
    // Predicated region
    $region2: #{tpu_custom_call.1} parent=1 // pred_check
      _
    $region3: #{tpu_custom_call.1} parent=1 // pred_check_branch
      %17 = sbr.rel (0) target = $region5
    $region4: #{tpu_custom_call.1} parent=1 // pred_region
      _
    $region5: #{tpu_custom_call.1} parent=1 // pred_fallthru
      _
    // Predicated region
    $region6: #{tpu_custom_call.1} parent=1 // pred_check
      _
    $region7: #{tpu_custom_call.1} parent=1 // pred_check_branch
      %19 = sbr.rel (0) target = $region9
    $region8: #{tpu_custom_call.1} parent=1 // pred_region
      _
    $region9: #{tpu_custom_call.1} parent=1 // pred_fallthru
      _
    // Predicated region
    $region10: #{tpu_custom_call.1} parent=1 // pred_check
      _
    $region11: #{tpu_custom_call.1} parent=1 // pred_check_branch
      %21 = sbr.rel (0) target = $region13
    $region12: #{tpu_custom_call.1} parent=1 // pred_region
      _
    $region13: #{tpu_custom_call.1} parent=1 // pred_fallthru
      _
    // Predicated region
    $region14: #{tpu_custom_call.1} parent=1 // pred_check
      _
    $region15: #{tpu_custom_call.1} parent=1 // pred_check_branch
      %23 = sbr.rel (0) target = $region17
    $region16: #{tpu_custom_call.1} parent=1 // pred_region
      _
    $region17: #{tpu_custom_call.1} parent=1 // pred_fallthru
      _
    // Predicated region
    $region18: #{tpu_custom_call.1} parent=1 // pred_check
      _
    $region19: #{tpu_custom_call.1} parent=1 // pred_check_branch
      %25 = sbr.rel (0) target = $region21
    $region20: #{tpu_custom_call.1} parent=1 // pred_region
      _
    $region21: #{tpu_custom_call.1} parent=1 // pred_fallthru
      _
    // Predicated region
    $region22: #{tpu_custom_call.1} parent=1 // pred_check
      _
    $region23: #{tpu_custom_call.1} parent=1 // pred_check_branch
      %27 = sbr.rel (0) target = $region25
    $region24: #{tpu_custom_call.1} parent=1 // pred_region
      _
    $region25: #{tpu_custom_call.1} parent=1 // pred_fallthru
      _
    // Predicated region
    $region26: #{tpu_custom_call.1} parent=1 // pred_check
      _
    $region27: #{tpu_custom_call.1} parent=1 // pred_check_branch
      %29 = sbr.rel (0) target = $region29
    $region28: #{tpu_custom_call.1} parent=1 // pred_region
      _
    $region29: #{tpu_custom_call.1} parent=1 // pred_fallthru
      _
    %v30 = vld [vmem:[%s0] sm:$0xff]
    %v31 = vld [vmem:[%s0 + $0x8] sm:$0xff]
    %v32 = vld [vmem:[%s3] sm:$0x1]
    %v33 = vld [vmem:[%s1] sm:$0xff]
    %v34 = vld [vmem:[%s1 + $0x8] sm:$0xff]
    %v35 = vld [vmem:[%s1 + $0x10] sm:$0xff]
    %v36 = vld [vmem:[%s1 + $0x18] sm:$0xff]
    %v37 = vld [vmem:[%s2] sm:$0x1]
    %v39 = vperm.slane %v37, 0
    %vm41 = vcmask 261120
    %v43 = vsel %vm41, %v30, 0
    %v46 = vsel %vm41, %v31, 0
    %48 = vmatpush.msra.mxu0 0.0
    %49 = vmatpush.msra.mxu0 0.0
    %50 = vmatpush.msra.mxu0 0.0
    %51 = vmatpush.msra.mxu0 0.0
    %52 = vmatpush.msra.mxu0 0.0
    %53 = vmatpush.msra.mxu0 0.0
    %54 = vmatpush.msra.mxu0 0.0
    %55 = vmatpush.msra.mxu0 0.0
    %56 = vmatpush.msra.mxu0 0.0
    %57 = vmatpush.msra.mxu0 0.0
    %58 = vmatpush.msra.mxu0 0.0
    %59 = vmatpush.msra.mxu0 0.0
    %60 = vmatpush.msra.mxu0 %v36
    %61 = vmatpush.msra.mxu0 %v35
    %62 = vmatpush.msra.mxu0 %v34
    %63 = vmatpush.msra.mxu0 %v33
    %64 = vmatmul.f32.gmra.mxu0 %v43
    %v65 = vpop.f32.mrf.mxu0
    %v66 = vadd.f32 %v39, %v65
    %67 = vmatmul.f32.gmra.mxu0 %v46
    %v68 = vpop.f32.mrf.mxu0
    %v69 = vadd.f32 %v39, %v68
    %70 = vdwg.mxu0
    %71 = vxpose.xlu0.b32.start [1/16] %v66, 128
    %72 = vxpose.xlu0.b32.cont [2/16] %v69, 128
    %73 = vxpose.xlu0.b32.cont [3/16] 0.0, 128
    %74 = vxpose.xlu0.b32.cont [4/16] 0.0, 128
    %75 = vxpose.xlu0.b32.cont [5/16] 0.0, 128
    %76 = vxpose.xlu0.b32.cont [6/16] 0.0, 128
    %77 = vxpose.xlu0.b32.cont [7/16] 0.0, 128
    %78 = vxpose.xlu0.b32.cont [8/16] 0.0, 128
    %79 = vxpose.xlu0.b32.cont [9/16] 0.0, 128
    %80 = vxpose.xlu0.b32.cont [10/16] 0.0, 128
    %81 = vxpose.xlu0.b32.cont [11/16] 0.0, 128
    %82 = vxpose.xlu0.b32.cont [12/16] 0.0, 128
    %83 = vxpose.xlu0.b32.cont [13/16] 0.0, 128
    %84 = vxpose.xlu0.b32.cont [14/16] 0.0, 128
    %85 = vxpose.xlu0.b32.cont [15/16] 0.0, 128
    %86 = vxpose.xlu0.b32.end [16/16] 0.0, 128
    %v87 = vpop.trf.xlu0
    %v88 = vpop.trf.xlu0
    %v89 = vpop.trf.xlu0
    %v90 = vpop.trf.xlu0
    %v91 = vpop.trf.xlu0
    %v92 = vpop.trf.xlu0
    %v93 = vpop.trf.xlu0
    %v94 = vpop.trf.xlu0
    %v95 = vpop.trf.xlu0
    %v96 = vpop.trf.xlu0
    %v97 = vpop.trf.xlu0
    %v98 = vpop.trf.xlu0
    %v99 = vpop.trf.xlu0
    %v100 = vpop.trf.xlu0
    %v101 = vpop.trf.xlu0
    %v102 = vpop.trf.xlu0
    %vm103 = vcmp.gt.f32.partialorder %v32, 0.0
    %vm104 = vcmp.gt.f32.partialorder %v87, -0.84729785
    %v105 = vsel %vm103, 1, 0
    %v106 = vperm.slane %v105, 0
    %vm107 = vcmp.eq.s32.totalorder %v106, 1
    %vm108 = vmand %vm104, %vm107
    %v109 = vsel %vm108, 1, 0
    %v110 = vcvt.s32.f32 %v109
    %v111 = vld [vmem:[%s4] sm:$0xff]
    %v112 = vld [vmem:[%s4 + $0x8] sm:$0xff]
    %v113 = vld [vmem:[%s5] sm:$0xff]
    %v114 = vld [vmem:[%s5 + $0x8] sm:$0xff]
    %v115 = vld [vmem:[%s6] sm:$0xff]
    %v116 = vld [vmem:[%s6 + $0x8] sm:$0xff]
    %vm117 = vcmp.gt.f32.partialorder %v115, 0.0
    %vm118 = vcmp.gt.f32.partialorder %v116, 0.0
    %v119 = vlaneseq
    %v120 = vand.u32 %v119, 127
    %121 = vset.pattern.permute.xlu0 0
    %122 = vperm.xlu0 %121, %v111
    %v123 = vpop.permute.xlu0 %122
    %124 = vset.pattern.permute.xlu0 0
    %125 = vperm.xlu0 %124, %v112
    %v126 = vpop.permute.xlu0 %125
    %vm127 = vcmp.eq.s32.totalorder %v120, %v123
    %vm128 = vcmp.eq.s32.totalorder %v120, %v126
    %v129 = vsel %vm117, 1, 0
    %v130 = vsel %vm118, 1, 0
    %131 = vset.pattern.permute.xlu0 0
    %132 = vperm.xlu0 %131, %v129
    %v133 = vpop.permute.xlu0 %132
    %134 = vset.pattern.permute.xlu0 0
    %135 = vperm.xlu0 %134, %v130
    %v136 = vpop.permute.xlu0 %135
    %vm137 = vcmp.eq.s32.totalorder %v133, 1
    %vm138 = vcmp.eq.s32.totalorder %v136, 1
    %vm139 = vmand %vm127, %vm137
    %vm140 = vmand %vm128, %vm138
    %v141 = vsel %vm139, 1, 0
    %v142 = vsel %vm140, 1, 0
    %v143 = vcvt.s32.f32 %v141
    %v144 = vcvt.s32.f32 %v142
    %vm145 = vcmask 130048
    %v146 = vsel %vm145, %v143, -inf
    %v147 = vsel %vm145, %v144, -inf
    %v148 = vmax.f32 %v146, %v147
    %v149 = vrot.slane %v148, 4
    %v150 = vmax.f32 %v148, %v149
    %v151 = vrot.slane %v150, 2
    %v152 = vmax.f32 %v150, %v151
    %v153 = vrot.slane %v152, 1
    %v154 = vmax.f32 %v152, %v153
    %155 = vset.pattern.permute.xlu0 0
    %156 = vperm.xlu0 %155, %v113
    %v157 = vpop.permute.xlu0 %156
    %158 = vset.pattern.permute.xlu0 0
    %159 = vperm.xlu0 %158, %v114
    %v160 = vpop.permute.xlu0 %159
    %vm161 = vcmp.eq.s32.totalorder %v120, %v157
    %vm162 = vcmp.eq.s32.totalorder %v120, %v160
    %vm163 = vmand %vm161, %vm137
    %vm164 = vmand %vm162, %vm138
    %v165 = vsel %vm163, 1, 0
    %v166 = vsel %vm164, 1, 0
    %v167 = vcvt.s32.f32 %v165
    %v168 = vcvt.s32.f32 %v166
    %v169 = vsel %vm145, %v167, -inf
    %v170 = vsel %vm145, %v168, -inf
    %v171 = vmax.f32 %v169, %v170
    %v172 = vrot.slane %v171, 4
    %v173 = vmax.f32 %v171, %v172
    %v174 = vrot.slane %v173, 2
    %v175 = vmax.f32 %v173, %v174
    %v176 = vrot.slane %v175, 1
    %v177 = vmax.f32 %v175, %v176
    %vm178 = vcmask 1040384
    %v179 = vsel %vm178, %v154, %v177
    %v181 = vperm.slane %v32, 0
    %v183 = vmul.f32 %v179, %v181
    %v184 = vmax.f32 %v87, 0.0
    %v185 = vmul.f32 %v87, %v183
    %v186 = vsub.f32 %v184, %v185
    %v187 = vand.u32 2147483647, %v87
    %v188 = vsub.f32 0.0, %v187
    %v189 = vmul.f32 %v188, 1.442695
    %v190 = vpow.pop %v189
    %v191 = vadd.f32 %v190, 1.0
    %v192 = vlog2.pop %v191
    %v193 = vmul.f32 %v192, 0.6931472
    %v194 = vmul.f32 -0.5, %v190
    %v195 = vadd.f32 %v194, 1.0
    %v196 = vmul.f32 %v195, %v190
    %v197 = vand.u32 2147483647, %v190
    %vm198 = vcmp.lt.f32.partialorder %v197, 0.0004427343
    %v199 = vsel %vm198, %v196, %v193
    %v200 = vadd.f32 %v186, %v199
    %v201 = vmul.f32 %v200, %v181
    %v203 = vrot.slane %v110, 6
    %v206 = vrot.slane %v183, 4
    %v209 = vrot.slane %v201, 2
    %vm211 = vcmask 1041408
    %v212 = vsel %vm211, %v87, %v203
    %vm213 = vcmask 1043456
    %v214 = vsel %vm213, %v212, %v206
    %vm215 = vcmask 1045504
    %v216 = vsel %vm215, %v214, %v209
    %217 = vst.msk [vmem:[#allocation2] sm:$0xff] %vm145, %v216
    %vm218 = vcmp.gt.f32.partialorder %v110, 0.0
    %v219 = vsel %vm218, 1, 0
    %v220 = vrot.slane %v219, 1
    %vm221 = vcmp.ne.s32.totalorder %v220, 0
    %vm222 = vmand %vm218, %vm221
    %v224 = vrot.slane %v87, 1
    %v226 = vadd.f32 %v87, %v224
    %v227 = vmul.f32 %v226, 0.5
    %v228 = vsel %vm222, %v227, -1000.0
    %229 = vrot.lane.b32.xlu0 %v87, 127
    %v230 = vpop.permute.xlu0 %229
    %vm232 = vcmask 121856
    %v233 = vsel %vm232, %v230, 0.0
    %234 = vrot.lane.b32.xlu0 %v110, 127
    %v235 = vpop.permute.xlu0 %234
    %v237 = vsel %vm232, %v235, 0.0
    %vm238 = vcmp.gt.f32.partialorder %v237, 0.0
    %v239 = vsel %vm238, 1, 0
    %v240 = vrot.slane %v239, 1
    %vm241 = vcmp.ne.s32.totalorder %v240, 0
    %vm242 = vmand %vm218, %vm241
    %v244 = vrot.slane %v233, 1
    %v246 = vadd.f32 %v87, %v244
    %v247 = vmul.f32 %v246, 0.5
    %v248 = vsel %vm242, %v247, -1000.0
    %249 = vrot.lane.b32.xlu0 %v87, 126
    %v250 = vpop.permute.xlu0 %249
    %vm252 = vcmask 113664
    %v253 = vsel %vm252, %v250, 0.0
    %254 = vrot.lane.b32.xlu0 %v110, 126
    %v255 = vpop.permute.xlu0 %254
    %v257 = vsel %vm252, %v255, 0.0
    %vm258 = vcmp.gt.f32.partialorder %v257, 0.0
    %v259 = vsel %vm258, 1, 0
    %v260 = vrot.slane %v259, 1
    %vm261 = vcmp.ne.s32.totalorder %v260, 0
    %vm262 = vmand %vm218, %vm261
    %v264 = vrot.slane %v253, 1
    %v266 = vadd.f32 %v87, %v264
    %v267 = vmul.f32 %v266, 0.5
    %v268 = vsel %vm262, %v267, -1000.0
    %269 = vrot.lane.b32.xlu0 %v87, 125
    %v270 = vpop.permute.xlu0 %269
    %vm272 = vcmask 105472
    %v273 = vsel %vm272, %v270, 0.0
    %274 = vrot.lane.b32.xlu0 %v110, 125
    %v275 = vpop.permute.xlu0 %274
    %v277 = vsel %vm272, %v275, 0.0
    %vm278 = vcmp.gt.f32.partialorder %v277, 0.0
    %v279 = vsel %vm278, 1, 0
    %v280 = vrot.slane %v279, 1
    %vm281 = vcmp.ne.s32.totalorder %v280, 0
    %vm282 = vmand %vm218, %vm281
    %v284 = vrot.slane %v273, 1
    %v286 = vadd.f32 %v87, %v284
    %v287 = vmul.f32 %v286, 0.5
    %v288 = vsel %vm282, %v287, -1000.0
    %v290 = vrot.slane %v248, 7
    %v293 = vrot.slane %v268, 6
    %v296 = vrot.slane %v288, 5
    %v298 = vsel %vm178, %v228, %v290
    %v299 = vsel %vm211, %v298, %v293
    %vm300 = vcmask 1042432
    %v301 = vsel %vm300, %v299, %v296
    %vm302 = vcmask 125952
    %303 = vst.msk [vmem:[#allocation4] sm:$0xf] %vm302, %v301
    %s304 = scalar_lea.vmem %s0, 16
    %v305 = vld [vmem:[%s304] sm:$0xff]
    %v306 = vld [vmem:[%s304 + $0x8] sm:$0xff]
    %s307 = scalar_lea.vmem %s3, 1
    %v308 = vld [vmem:[%s307] sm:$0x1]
    %v309 = vld [vmem:[%s1] sm:$0xff]
    %v310 = vld [vmem:[%s1 + $0x8] sm:$0xff]
    %v311 = vld [vmem:[%s1 + $0x10] sm:$0xff]
    %v312 = vld [vmem:[%s1 + $0x18] sm:$0xff]
    %v313 = vld [vmem:[%s2] sm:$0x1]
    %v315 = vperm.slane %v313, 0
    %v318 = vsel %vm41, %v305, 0
    %v321 = vsel %vm41, %v306, 0
    %323 = vmatpush.msra.mxu0 0.0
    %324 = vmatpush.msra.mxu0 0.0
    %325 = vmatpush.msra.mxu0 0.0
    %326 = vmatpush.msra.mxu0 0.0
    %327 = vmatpush.msra.mxu0 0.0
    %328 = vmatpush.msra.mxu0 0.0
    %329 = vmatpush.msra.mxu0 0.0
    %330 = vmatpush.msra.mxu0 0.0
    %331 = vmatpush.msra.mxu0 0.0
    %332 = vmatpush.msra.mxu0 0.0
    %333 = vmatpush.msra.mxu0 0.0
    %334 = vmatpush.msra.mxu0 0.0
    %335 = vmatpush.msra.mxu0 %v312
    %336 = vmatpush.msra.mxu0 %v311
    %337 = vmatpush.msra.mxu0 %v310
    %338 = vmatpush.msra.mxu0 %v309
    %339 = vmatmul.f32.gmra.mxu0 %v318
    %v340 = vpop.f32.mrf.mxu0
    %v341 = vadd.f32 %v315, %v340
    %342 = vmatmul.f32.gmra.mxu0 %v321
    %v343 = vpop.f32.mrf.mxu0
    %v344 = vadd.f32 %v315, %v343
    %345 = vdwg.mxu0
    %346 = vxpose.xlu0.b32.start [1/16] %v341, 128
    %347 = vxpose.xlu0.b32.cont [2/16] %v344, 128
    %348 = vxpose.xlu0.b32.cont [3/16] 0.0, 128
    %349 = vxpose.xlu0.b32.cont [4/16] 0.0, 128
    %350 = vxpose.xlu0.b32.cont [5/16] 0.0, 128
    %351 = vxpose.xlu0.b32.cont [6/16] 0.0, 128
    %352 = vxpose.xlu0.b32.cont [7/16] 0.0, 128
    %353 = vxpose.xlu0.b32.cont [8/16] 0.0, 128
    %354 = vxpose.xlu0.b32.cont [9/16] 0.0, 128
    %355 = vxpose.xlu0.b32.cont [10/16] 0.0, 128
    %356 = vxpose.xlu0.b32.cont [11/16] 0.0, 128
    %357 = vxpose.xlu0.b32.cont [12/16] 0.0, 128
    %358 = vxpose.xlu0.b32.cont [13/16] 0.0, 128
    %359 = vxpose.xlu0.b32.cont [14/16] 0.0, 128
    %360 = vxpose.xlu0.b32.cont [15/16] 0.0, 128
    %361 = vxpose.xlu0.b32.end [16/16] 0.0, 128
    %v362 = vpop.trf.xlu0
    %v363 = vpop.trf.xlu0
    %v364 = vpop.trf.xlu0
    %v365 = vpop.trf.xlu0
    %v366 = vpop.trf.xlu0
    %v367 = vpop.trf.xlu0
    %v368 = vpop.trf.xlu0
    %v369 = vpop.trf.xlu0
    %v370 = vpop.trf.xlu0
    %v371 = vpop.trf.xlu0
    %v372 = vpop.trf.xlu0
    %v373 = vpop.trf.xlu0
    %v374 = vpop.trf.xlu0
    %v375 = vpop.trf.xlu0
    %v376 = vpop.trf.xlu0
    %v377 = vpop.trf.xlu0
    %vm378 = vcmp.gt.f32.partialorder %v308, 0.0
    %vm379 = vcmp.gt.f32.partialorder %v362, -0.84729785
    %v380 = vsel %vm378, 1, 0
    %v381 = vperm.slane %v380, 0
    %vm382 = vcmp.eq.s32.totalorder %v381, 1
    %vm383 = vmand %vm379, %vm382
    %v384 = vsel %vm383, 1, 0
    %v385 = vcvt.s32.f32 %v384
    %s386 = scalar_lea.vmem %s4, 16
    %v387 = vld [vmem:[%s386] sm:$0xff]
    %v388 = vld [vmem:[%s386 + $0x8] sm:$0xff]
    %s389 = scalar_lea.vmem %s5, 16
    %v390 = vld [vmem:[%s389] sm:$0xff]
    %v391 = vld [vmem:[%s389 + $0x8] sm:$0xff]
    %s392 = scalar_lea.vmem %s6, 16
    %v393 = vld [vmem:[%s392] sm:$0xff]
    %v394 = vld [vmem:[%s392 + $0x8] sm:$0xff]
    %vm395 = vcmp.gt.f32.partialorder %v393, 0.0
    %vm396 = vcmp.gt.f32.partialorder %v394, 0.0
    %397 = vset.pattern.permute.xlu0 0
    %398 = vperm.xlu0 %397, %v387
    %v399 = vpop.permute.xlu0 %398
    %400 = vset.pattern.permute.xlu0 0
    %401 = vperm.xlu0 %400, %v388
    %v402 = vpop.permute.xlu0 %401
    %vm403 = vcmp.eq.s32.totalorder %v120, %v399
    %vm404 = vcmp.eq.s32.totalorder %v120, %v402
    %v405 = vsel %vm395, 1, 0
    %v406 = vsel %vm396, 1, 0
    %407 = vset.pattern.permute.xlu0 0
    %408 = vperm.xlu0 %407, %v405
    %v409 = vpop.permute.xlu0 %408
    %410 = vset.pattern.permute.xlu0 0
    %411 = vperm.xlu0 %410, %v406
    %v412 = vpop.permute.xlu0 %411
    %vm413 = vcmp.eq.s32.totalorder %v409, 1
    %vm414 = vcmp.eq.s32.totalorder %v412, 1
    %vm415 = vmand %vm403, %vm413
    %vm416 = vmand %vm404, %vm414
    %v417 = vsel %vm415, 1, 0
    %v418 = vsel %vm416, 1, 0
    %v419 = vcvt.s32.f32 %v417
    %v420 = vcvt.s32.f32 %v418
    %v421 = vsel %vm145, %v419, -inf
    %v422 = vsel %vm145, %v420, -inf
    %v423 = vmax.f32 %v421, %v422
    %v424 = vrot.slane %v423, 4
    %v425 = vmax.f32 %v423, %v424
    %v426 = vrot.slane %v425, 2
    %v427 = vmax.f32 %v425, %v426
    %v428 = vrot.slane %v427, 1
    %v429 = vmax.f32 %v427, %v428
    %430 = vset.pattern.permute.xlu0 0
    %431 = vperm.xlu0 %430, %v390
    %v432 = vpop.permute.xlu0 %431
    %433 = vset.pattern.permute.xlu0 0
    %434 = vperm.xlu0 %433, %v391
    %v435 = vpop.permute.xlu0 %434
    %vm436 = vcmp.eq.s32.totalorder %v120, %v432
    %vm437 = vcmp.eq.s32.totalorder %v120, %v435
    %vm438 = vmand %vm436, %vm413
    %vm439 = vmand %vm437, %vm414
    %v440 = vsel %vm438, 1, 0
    %v441 = vsel %vm439, 1, 0
    %v442 = vcvt.s32.f32 %v440
    %v443 = vcvt.s32.f32 %v441
    %v444 = vsel %vm145, %v442, -inf
    %v445 = vsel %vm145, %v443, -inf
    %v446 = vmax.f32 %v444, %v445
    %v447 = vrot.slane %v446, 4
    %v448 = vmax.f32 %v446, %v447
    %v449 = vrot.slane %v448, 2
    %v450 = vmax.f32 %v448, %v449
    %v451 = vrot.slane %v450, 1
    %v452 = vmax.f32 %v450, %v451
    %v453 = vsel %vm178, %v429, %v452
    %v455 = vperm.slane %v308, 0
    %v457 = vmul.f32 %v453, %v455
    %v458 = vmax.f32 %v362, 0.0
    %v459 = vmul.f32 %v362, %v457
    %v460 = vsub.f32 %v458, %v459
    %v461 = vand.u32 2147483647, %v362
    %v462 = vsub.f32 0.0, %v461
    %v463 = vmul.f32 %v462, 1.442695
    %v464 = vpow.pop %v463
    %v465 = vadd.f32 %v464, 1.0
    %v466 = vlog2.pop %v465
    %v467 = vmul.f32 %v466, 0.6931472
    %v468 = vmul.f32 -0.5, %v464
    %v469 = vadd.f32 %v468, 1.0
    %v470 = vmul.f32 %v469, %v464
    %v471 = vand.u32 2147483647, %v464
    %vm472 = vcmp.lt.f32.partialorder %v471, 0.0004427343
    %v473 = vsel %vm472, %v470, %v467
    %v474 = vadd.f32 %v460, %v473
    %v475 = vmul.f32 %v474, %v455
    %v477 = vrot.slane %v385, 6
    %v480 = vrot.slane %v457, 4
    %v483 = vrot.slane %v475, 2
    %v485 = vsel %vm211, %v362, %v477
    %v486 = vsel %vm213, %v485, %v480
    %v487 = vsel %vm215, %v486, %v483
    %s488 = scalar_lea.vmem [#allocation2], 8
    %489 = vst.msk [vmem:[%s488] sm:$0xff] %vm145, %v487
    %vm490 = vcmp.gt.f32.partialorder %v385, 0.0
    %v491 = vsel %vm490, 1, 0
    %v492 = vrot.slane %v491, 1
    %vm493 = vcmp.ne.s32.totalorder %v492, 0
    %vm494 = vmand %vm490, %vm493
    %v496 = vrot.slane %v362, 1
    %v498 = vadd.f32 %v362, %v496
    %v499 = vmul.f32 %v498, 0.5
    %v500 = vsel %vm494, %v499, -1000.0
    %501 = vrot.lane.b32.xlu0 %v362, 127
    %v502 = vpop.permute.xlu0 %501
    %v504 = vsel %vm232, %v502, 0.0
    %505 = vrot.lane.b32.xlu0 %v385, 127
    %v506 = vpop.permute.xlu0 %505
    %v508 = vsel %vm232, %v506, 0.0
    %vm509 = vcmp.gt.f32.partialorder %v508, 0.0
    %v510 = vsel %vm509, 1, 0
    %v511 = vrot.slane %v510, 1
    %vm512 = vcmp.ne.s32.totalorder %v511, 0
    %vm513 = vmand %vm490, %vm512
    %v515 = vrot.slane %v504, 1
    %v517 = vadd.f32 %v362, %v515
    %v518 = vmul.f32 %v517, 0.5
    %v519 = vsel %vm513, %v518, -1000.0
    %520 = vrot.lane.b32.xlu0 %v362, 126
    %v521 = vpop.permute.xlu0 %520
    %v523 = vsel %vm252, %v521, 0.0
    %524 = vrot.lane.b32.xlu0 %v385, 126
    %v525 = vpop.permute.xlu0 %524
    %v527 = vsel %vm252, %v525, 0.0
    %vm528 = vcmp.gt.f32.partialorder %v527, 0.0
    %v529 = vsel %vm528, 1, 0
    %v530 = vrot.slane %v529, 1
    %vm531 = vcmp.ne.s32.totalorder %v530, 0
    %vm532 = vmand %vm490, %vm531
    %v534 = vrot.slane %v523, 1
    %v536 = vadd.f32 %v362, %v534
    %v537 = vmul.f32 %v536, 0.5
    %v538 = vsel %vm532, %v537, -1000.0
    %539 = vrot.lane.b32.xlu0 %v362, 125
    %v540 = vpop.permute.xlu0 %539
    %v542 = vsel %vm272, %v540, 0.0
    %543 = vrot.lane.b32.xlu0 %v385, 125
    %v544 = vpop.permute.xlu0 %543
    %v546 = vsel %vm272, %v544, 0.0
    %vm547 = vcmp.gt.f32.partialorder %v546, 0.0
    %v548 = vsel %vm547, 1, 0
    %v549 = vrot.slane %v548, 1
    %vm550 = vcmp.ne.s32.totalorder %v549, 0
    %vm551 = vmand %vm490, %vm550
    %v553 = vrot.slane %v542, 1
    %v555 = vadd.f32 %v362, %v553
    %v556 = vmul.f32 %v555, 0.5
    %v557 = vsel %vm551, %v556, -1000.0
    %v559 = vrot.slane %v519, 7
    %v562 = vrot.slane %v538, 6
    %v565 = vrot.slane %v557, 5
    %v567 = vsel %vm178, %v500, %v559
    %v568 = vsel %vm211, %v567, %v562
    %v569 = vsel %vm300, %v568, %v565
    %s570 = scalar_lea.vmem [#allocation4], 4
    %571 = vst.msk [vmem:[%s570] sm:$0xf] %vm302, %v569
    // Predicated region
    $region30: #{tpu_custom_call.1} parent=1 // pred_check
      _
    $region31: #{tpu_custom_call.1} parent=1 // pred_check_branch
      %573 = sbr.rel (0) target = $region33
    $region32: #{tpu_custom_call.1} parent=1 // pred_region
      %575 = vsyncadd [#allocation3], 0
      %s576 = sshll.u32 [#allocation2], 4
      %s577 = int_to_ptr.vmem [resolvable:$true] %s576
      %s578 = sshll.u32 %s7, 4
      %s579 = int_to_ptr.hbm [resolvable:$true] %s578
      %584 = dma.vmem_to_hbm [thread:$0]  %s577, 256, %s579, [#allocation3], 128, 128, 8
    $region33: #{tpu_custom_call.1} parent=1 // pred_fallthru
      _
    // Predicated region
    $region34: #{tpu_custom_call.1} parent=1 // pred_check
      _
    $region35: #{tpu_custom_call.1} parent=1 // pred_check_branch
      %586 = sbr.rel (0) target = $region37
    $region36: #{tpu_custom_call.1} parent=1 // pred_region
      %588 = vsyncadd [#allocation5], 0
      %s589 = sshll.u32 [#allocation4], 4
      %s590 = int_to_ptr.vmem [resolvable:$true] %s589
      %s591 = sshll.u32 %s8, 4
      %s592 = int_to_ptr.hbm [resolvable:$true] %s591
      %597 = dma.vmem_to_hbm [thread:$0]  %s590, 128, %s592, [#allocation5], 64, 64, 4
    $region37: #{tpu_custom_call.1} parent=1 // pred_fallthru
      _
    // Predicated region
    $region38: #{tpu_custom_call.1} parent=1 // pred_check
      _
    $region39: #{tpu_custom_call.1} parent=1 // pred_check_branch
      %599 = sbr.rel (0) target = $region41
    $region40: #{tpu_custom_call.1} parent=1 // pred_region
      %601 = dma.done [#allocation3], 256
    $region41: #{tpu_custom_call.1} parent=1 // pred_fallthru
      _
    // Predicated region
    $region42: #{tpu_custom_call.1} parent=1 // pred_check
      _
    $region43: #{tpu_custom_call.1} parent=1 // pred_check_branch
      %603 = sbr.rel (0) target = $region45
    $region44: #{tpu_custom_call.1} parent=1 // pred_region
      %605 = dma.done [#allocation5], 128
    $region45: #{tpu_custom_call.1} parent=1 // pred_fallthru
      _
    %606 = vsyncpa [#allocation3], 1
    %607 = vsyncpa [#allocation5], 1

</llo_original>
